<compile_context>
chip_gen: v5e
topology: v5e:2x2
jax: 0.10.0
libtpu: 0.0.40
codegen_flags: <defaults>
</compile_context>

<pallas_src>
import functools

import jax
import jax.numpy as jnp
from jax.experimental import pallas as pl
from jax.experimental.pallas import tpu as pltpu

_LANES = 128


def _gather_block_kernel(tn, tok_ref, table_ref, out_ref, sem):
    """Gather `tn` embedding rows for grid block `pl.program_id(0)`.

    tok_ref   : (N_pad,) int32 in SMEM (scalar-prefetched token ids)
    table_ref : (V, D) table ref; HBM (pl.ANY) or VMEM-resident (small vocab)
    out_ref   : (tn, D) VMEM pipelined output block — rows DMA'd directly in
    sem       : single DMA semaphore shared by every row copy of this block
    """
    base = pl.program_id(0) * tn
    groups = tn // 8  # tn is always a multiple of 8

    # Issue every row DMA for this block; they all stay in flight at once.
    @pl.loop(0, groups)
    def _issue(g):
        j0 = pl.multiple_of(g * 8, 8)
        for u in range(8):  # static 8-wide unroll inside the rolled loop
            j = j0 + u
            row = tok_ref[base + j]
            pltpu.make_async_copy(
                table_ref.at[pl.ds(row, 1), :],
                out_ref.at[pl.ds(j, 1), :],
                sem,
            ).start()

    # Drain: all copies are the same size, so tn waits on the shared semaphore
    # guarantee every row has landed before the block is written back.
    @pl.loop(0, groups)
    def _drain(g):
        j0 = pl.multiple_of(g * 8, 8)
        for u in range(8):
            j = j0 + u
            pltpu.make_async_copy(
                table_ref.at[pl.ds(0, 1), :],
                out_ref.at[pl.ds(j, 1), :],
                sem,
            ).wait()


def token_embedding(tokens, table, *, block_tokens=256, table_in_vmem=None):
    """Embedding look-up.  tokens: int array [...], table: [V, D] -> [..., D]."""
    V, D = table.shape
    lead_shape = tuple(int(s) for s in tokens.shape)
    N = 1
    for s in lead_shape:
        N *= s

    # Explicit OOB semantics: clamp ids into [0, V-1].  (PyTorch nn.Embedding
    # errors on OOB; clamping is the documented behaviour here.)
    tok = jnp.clip(tokens.reshape(N).astype(jnp.int32), 0, V - 1)

    itemsize = jnp.dtype(table.dtype).itemsize
    row_vmem_bytes = (pl.cdiv(D, _LANES) * _LANES) * itemsize  # VMEM layout width

    # Block size: large enough to amortise per-step overhead, capped so the
    # output double-buffer stays <= ~16 MiB (fits v7x's smaller VMEM).
    tn = max(8, int(block_tokens))
    tn = min(tn, max(8, (16 * 1024 * 1024) // (2 * row_vmem_bytes)))
    tn = min(tn, pl.cdiv(N, 8) * 8)  # don't overshoot tiny inputs
    tn = max(8, (tn // 8) * 8)
    n_blocks = pl.cdiv(N, tn)
    N_pad = n_blocks * tn
    if N_pad != N:
        tok = jnp.pad(tok, (0, N_pad - N))  # padded ids gather row 0, dropped below

    # Small-vocab fast path: keep the whole table resident in VMEM.
    table_vmem_bytes = (pl.cdiv(V, 8) * 8) * row_vmem_bytes
    if table_in_vmem is None:
        table_in_vmem = table_vmem_bytes <= 4 * 1024 * 1024

    if table_in_vmem:
        # Constant index_map -> fetched once, stays resident across the grid;
        # per-row copies become cheap local (VMEM->VMEM) DMAs.
        table_spec = pl.BlockSpec((V, D), lambda b, ids: (0, 0))
        table_budget = 2 * table_vmem_bytes
    else:
        # Large vocab: table stays in HBM; rows are DMA-gathered per block.
        table_spec = pl.BlockSpec(memory_space=pl.ANY)
        table_budget = 0

    out_budget = 2 * tn * row_vmem_bytes  # double-buffered output block
    vmem_limit = min(max(out_budget + table_budget + (4 << 20), 16 << 20), 48 << 20)

    out = pl.pallas_call(
        functools.partial(_gather_block_kernel, tn),
        out_shape=jax.ShapeDtypeStruct((N_pad, D), table.dtype),
        grid_spec=pltpu.PrefetchScalarGridSpec(
            num_scalar_prefetch=1,                 # token ids -> SMEM
            grid=(n_blocks,),
            in_specs=[table_spec],
            out_specs=pl.BlockSpec((tn, D), lambda b, ids: (b, 0)),
            scratch_shapes=[pltpu.SemaphoreType.DMA(())],
        ),
        compiler_params=pltpu.CompilerParams(
            dimension_semantics=("parallel",),     # blocks are independent
            vmem_limit_bytes=int(vmem_limit),
        ),
        cost_estimate=pl.CostEstimate(
            flops=0,
            transcendentals=0,
            bytes_accessed=int(
                2 * N_pad * D * itemsize + 4 * N_pad
                + (V * D * itemsize if table_in_vmem else 0)
            ),
        ),
    )(tok, table)

    if N_pad != N:
        out = out[:N]
    return out.reshape(*lead_shape, D)


class TokenEmbeddingPallas:
    """JAX/Pallas analogue of claf TokenEmbedding with an embedding matrix."""

    def __init__(self, vocab_size, embedding_dim, key, dtype=jnp.float32):
        self.vocab_size = vocab_size
        self.embedding_dim = embedding_dim
        # Deterministic synthetic init (normal, like nn.Embedding default).
        self.weight = jax.random.normal(
            key, (vocab_size, embedding_dim), dtype=dtype
        )

    def forward(self, tokens):
        """embedding look-up"""
        return token_embedding(tokens, self.weight)

    def get_output_dim(self):
        """get embedding dimension"""
        return self.embedding_dim

    def get_vocab_size(self):
        return self.vocab_size


if __name__ == "__main__":
    key = jax.random.PRNGKey(0)
    k_w, k_t = jax.random.split(key)

    B, S = 2, 8          # batch, sequence length
    V, D = 50, 32        # vocab size, embedding dim

    emb = TokenEmbeddingPallas(V, D, k_w)
    tokens = jax.random.randint(k_t, (B, S), 0, V, dtype=jnp.int32)

    ref = jnp.take(emb.weight, tokens, axis=0)

    # VMEM-resident fast path (auto-selected for this small table).
    out_vmem = jax.block_until_ready(
        token_embedding(tokens, emb.weight, table_in_vmem=True)
    )
    # HBM row-gather path (what large vocabularies use) — forced for coverage.
    out_hbm = jax.block_until_ready(
        token_embedding(tokens, emb.weight, table_in_vmem=False)
    )
    # Default module path.
    out = jax.block_until_ready(emb.forward(tokens))

    assert out.shape == (B, S, D)
    assert jnp.array_equal(out_vmem, ref)
    assert jnp.array_equal(out_hbm, ref)
    assert jnp.array_equal(out, ref)

    print("KERNEL_OK")
</pallas_src>

<mosaic_0001>
module attributes {stable_mosaic.version = 11 : i64} {
  func.func @_gather_block_kernel(%arg0: i32, %arg1: memref<16xi32, #tpu.memory_space<smem>>, %arg2: memref<50x32xf32, #tpu.memory_space<vmem>>, %arg3: memref<16x32xf32, #tpu.memory_space<vmem>>, %arg4: memref<!tpu.dma_semaphore, #tpu.memory_space<semaphore_mem>>) attributes {dimension_semantics = [#tpu.dimension_semantics<parallel>], iteration_bounds = array<i64: 1>, scalar_prefetch = 1 : i64, scratch_operands = 1 : i64, tpu.core_type = #tpu.core_type<tc>, window_params = [{pipeline_mode = #tpu.pipeline_mode<synchronous>, transform_indices = @transform_0, window_bounds = array<i64: 50, 32>}, {transform_indices = @transform_1, window_bounds = array<i64: 16, 32>}]} {
    %c16_i32 = arith.constant 16 : i32
    %0 = arith.muli %arg0, %c16_i32 : i32
    %c0_i32 = arith.constant 0 : i32
    %c2_i32 = arith.constant 2 : i32
    %1 = arith.addi %c0_i32, %c2_i32 : i32
    %c1_i32 = arith.constant 1 : i32
    scf.for %arg5 = %c0_i32 to %1 step %c1_i32  : i32 {
      %c1_i32_5 = arith.constant 1 : i32
      %3 = arith.muli %arg5, %c1_i32_5 : i32
      %c0_i32_6 = arith.constant 0 : i32
      %4 = arith.addi %c0_i32_6, %3 : i32
      %c8_i32 = arith.constant 8 : i32
      %5 = arith.muli %4, %c8_i32 : i32
      %6 = tpu.assume_multiple %5, 8 : i32
      %c0_i32_7 = arith.constant 0 : i32
      %7 = arith.addi %6, %c0_i32_7 : i32
      %8 = arith.addi %0, %7 : i32
      %9 = arith.index_cast %8 : i32 to index
      %10 = memref.load %arg1[%9] : memref<16xi32, #tpu.memory_space<smem>>
      %c0_i32_8 = arith.constant 0 : i32
      %11 = tpu.memref_slice %arg2[%10, %c0_i32_8] : memref<50x32xf32, #tpu.memory_space<vmem>> -> memref<1x32xf32, #tpu.memory_space<vmem>>
      %c0_i32_9 = arith.constant 0 : i32
      %12 = tpu.memref_slice %arg3[%7, %c0_i32_9] : memref<16x32xf32, #tpu.memory_space<vmem>> -> memref<1x32xf32, #tpu.memory_space<vmem>>
      tpu.enqueue_dma source(%11 : memref<1x32xf32, #tpu.memory_space<vmem>>) target(%12 : memref<1x32xf32, #tpu.memory_space<vmem>>) target_semaphore(%arg4 : memref<!tpu.dma_semaphore, #tpu.memory_space<semaphore_mem>>)
      %c1_i32_10 = arith.constant 1 : i32
      %13 = arith.addi %6, %c1_i32_10 : i32
      %14 = arith.addi %0, %13 : i32
      %15 = arith.index_cast %14 : i32 to index
      %16 = memref.load %arg1[%15] : memref<16xi32, #tpu.memory_space<smem>>
      %c0_i32_11 = arith.constant 0 : i32
      %17 = tpu.memref_slice %arg2[%16, %c0_i32_11] : memref<50x32xf32, #tpu.memory_space<vmem>> -> memref<1x32xf32, #tpu.memory_space<vmem>>
      %c0_i32_12 = arith.constant 0 : i32
      %18 = tpu.memref_slice %arg3[%13, %c0_i32_12] : memref<16x32xf32, #tpu.memory_space<vmem>> -> memref<1x32xf32, #tpu.memory_space<vmem>>
      tpu.enqueue_dma source(%17 : memref<1x32xf32, #tpu.memory_space<vmem>>) target(%18 : memref<1x32xf32, #tpu.memory_space<vmem>>) target_semaphore(%arg4 : memref<!tpu.dma_semaphore, #tpu.memory_space<semaphore_mem>>)
      %c2_i32_13 = arith.constant 2 : i32
      %19 = arith.addi %6, %c2_i32_13 : i32
      %20 = arith.addi %0, %19 : i32
      %21 = arith.index_cast %20 : i32 to index
      %22 = memref.load %arg1[%21] : memref<16xi32, #tpu.memory_space<smem>>
      %c0_i32_14 = arith.constant 0 : i32
      %23 = tpu.memref_slice %arg2[%22, %c0_i32_14] : memref<50x32xf32, #tpu.memory_space<vmem>> -> memref<1x32xf32, #tpu.memory_space<vmem>>
      %c0_i32_15 = arith.constant 0 : i32
      %24 = tpu.memref_slice %arg3[%19, %c0_i32_15] : memref<16x32xf32, #tpu.memory_space<vmem>> -> memref<1x32xf32, #tpu.memory_space<vmem>>
      tpu.enqueue_dma source(%23 : memref<1x32xf32, #tpu.memory_space<vmem>>) target(%24 : memref<1x32xf32, #tpu.memory_space<vmem>>) target_semaphore(%arg4 : memref<!tpu.dma_semaphore, #tpu.memory_space<semaphore_mem>>)
      %c3_i32 = arith.constant 3 : i32
      %25 = arith.addi %6, %c3_i32 : i32
      %26 = arith.addi %0, %25 : i32
      %27 = arith.index_cast %26 : i32 to index
      %28 = memref.load %arg1[%27] : memref<16xi32, #tpu.memory_space<smem>>
      %c0_i32_16 = arith.constant 0 : i32
      %29 = tpu.memref_slice %arg2[%28, %c0_i32_16] : memref<50x32xf32, #tpu.memory_space<vmem>> -> memref<1x32xf32, #tpu.memory_space<vmem>>
      %c0_i32_17 = arith.constant 0 : i32
      %30 = tpu.memref_slice %arg3[%25, %c0_i32_17] : memref<16x32xf32, #tpu.memory_space<vmem>> -> memref<1x32xf32, #tpu.memory_space<vmem>>
      tpu.enqueue_dma source(%29 : memref<1x32xf32, #tpu.memory_space<vmem>>) target(%30 : memref<1x32xf32, #tpu.memory_space<vmem>>) target_semaphore(%arg4 : memref<!tpu.dma_semaphore, #tpu.memory_space<semaphore_mem>>)
      %c4_i32 = arith.constant 4 : i32
      %31 = arith.addi %6, %c4_i32 : i32
      %32 = arith.addi %0, %31 : i32
      %33 = arith.index_cast %32 : i32 to index
      %34 = memref.load %arg1[%33] : memref<16xi32, #tpu.memory_space<smem>>
      %c0_i32_18 = arith.constant 0 : i32
      %35 = tpu.memref_slice %arg2[%34, %c0_i32_18] : memref<50x32xf32, #tpu.memory_space<vmem>> -> memref<1x32xf32, #tpu.memory_space<vmem>>
      %c0_i32_19 = arith.constant 0 : i32
      %36 = tpu.memref_slice %arg3[%31, %c0_i32_19] : memref<16x32xf32, #tpu.memory_space<vmem>> -> memref<1x32xf32, #tpu.memory_space<vmem>>
      tpu.enqueue_dma source(%35 : memref<1x32xf32, #tpu.memory_space<vmem>>) target(%36 : memref<1x32xf32, #tpu.memory_space<vmem>>) target_semaphore(%arg4 : memref<!tpu.dma_semaphore, #tpu.memory_space<semaphore_mem>>)
      %c5_i32 = arith.constant 5 : i32
      %37 = arith.addi %6, %c5_i32 : i32
      %38 = arith.addi %0, %37 : i32
      %39 = arith.index_cast %38 : i32 to index
      %40 = memref.load %arg1[%39] : memref<16xi32, #tpu.memory_space<smem>>
      %c0_i32_20 = arith.constant 0 : i32
      %41 = tpu.memref_slice %arg2[%40, %c0_i32_20] : memref<50x32xf32, #tpu.memory_space<vmem>> -> memref<1x32xf32, #tpu.memory_space<vmem>>
      %c0_i32_21 = arith.constant 0 : i32
      %42 = tpu.memref_slice %arg3[%37, %c0_i32_21] : memref<16x32xf32, #tpu.memory_space<vmem>> -> memref<1x32xf32, #tpu.memory_space<vmem>>
      tpu.enqueue_dma source(%41 : memref<1x32xf32, #tpu.memory_space<vmem>>) target(%42 : memref<1x32xf32, #tpu.memory_space<vmem>>) target_semaphore(%arg4 : memref<!tpu.dma_semaphore, #tpu.memory_space<semaphore_mem>>)
      %c6_i32 = arith.constant 6 : i32
      %43 = arith.addi %6, %c6_i32 : i32
      %44 = arith.addi %0, %43 : i32
      %45 = arith.index_cast %44 : i32 to index
      %46 = memref.load %arg1[%45] : memref<16xi32, #tpu.memory_space<smem>>
      %c0_i32_22 = arith.constant 0 : i32
      %47 = tpu.memref_slice %arg2[%46, %c0_i32_22] : memref<50x32xf32, #tpu.memory_space<vmem>> -> memref<1x32xf32, #tpu.memory_space<vmem>>
      %c0_i32_23 = arith.constant 0 : i32
      %48 = tpu.memref_slice %arg3[%43, %c0_i32_23] : memref<16x32xf32, #tpu.memory_space<vmem>> -> memref<1x32xf32, #tpu.memory_space<vmem>>
      tpu.enqueue_dma source(%47 : memref<1x32xf32, #tpu.memory_space<vmem>>) target(%48 : memref<1x32xf32, #tpu.memory_space<vmem>>) target_semaphore(%arg4 : memref<!tpu.dma_semaphore, #tpu.memory_space<semaphore_mem>>)
      %c7_i32 = arith.constant 7 : i32
      %49 = arith.addi %6, %c7_i32 : i32
      %50 = arith.addi %0, %49 : i32
      %51 = arith.index_cast %50 : i32 to index
      %52 = memref.load %arg1[%51] : memref<16xi32, #tpu.memory_space<smem>>
      %c0_i32_24 = arith.constant 0 : i32
      %53 = tpu.memref_slice %arg2[%52, %c0_i32_24] : memref<50x32xf32, #tpu.memory_space<vmem>> -> memref<1x32xf32, #tpu.memory_space<vmem>>
      %c0_i32_25 = arith.constant 0 : i32
      %54 = tpu.memref_slice %arg3[%49, %c0_i32_25] : memref<16x32xf32, #tpu.memory_space<vmem>> -> memref<1x32xf32, #tpu.memory_space<vmem>>
      tpu.enqueue_dma source(%53 : memref<1x32xf32, #tpu.memory_space<vmem>>) target(%54 : memref<1x32xf32, #tpu.memory_space<vmem>>) target_semaphore(%arg4 : memref<!tpu.dma_semaphore, #tpu.memory_space<semaphore_mem>>)
    }
    %c2_i32_0 = arith.constant 2 : i32
    %c0_i32_1 = arith.constant 0 : i32
    %c2_i32_2 = arith.constant 2 : i32
    %2 = arith.addi %c0_i32_1, %c2_i32_2 : i32
    %c1_i32_3 = arith.constant 1 : i32
    scf.for %arg5 = %c0_i32_1 to %2 step %c1_i32_3  : i32 {
      %c1_i32_5 = arith.constant 1 : i32
      %3 = arith.muli %arg5, %c1_i32_5 : i32
      %c0_i32_6 = arith.constant 0 : i32
      %4 = arith.addi %c0_i32_6, %3 : i32
      %c8_i32 = arith.constant 8 : i32
      %5 = arith.muli %4, %c8_i32 : i32
      %6 = tpu.assume_multiple %5, 8 : i32
      %c0_i32_7 = arith.constant 0 : i32
      %7 = arith.addi %6, %c0_i32_7 : i32
      %c0_i32_8 = arith.constant 0 : i32
      %c0_i32_9 = arith.constant 0 : i32
      %8 = tpu.memref_slice %arg2[%c0_i32_8, %c0_i32_9] : memref<50x32xf32, #tpu.memory_space<vmem>> -> memref<1x32xf32, #tpu.memory_space<vmem>>
      %c0_i32_10 = arith.constant 0 : i32
      %9 = tpu.memref_slice %arg3[%7, %c0_i32_10] : memref<16x32xf32, #tpu.memory_space<vmem>> -> memref<1x32xf32, #tpu.memory_space<vmem>>
      tpu.wait_dma2 semaphore(%arg4 : memref<!tpu.dma_semaphore, #tpu.memory_space<semaphore_mem>>) src(%8 : memref<1x32xf32, #tpu.memory_space<vmem>>) dst(%9 : memref<1x32xf32, #tpu.memory_space<vmem>>)
      %c1_i32_11 = arith.constant 1 : i32
      %10 = arith.addi %6, %c1_i32_11 : i32
      %c0_i32_12 = arith.constant 0 : i32
      %c0_i32_13 = arith.constant 0 : i32
      %11 = tpu.memref_slice %arg2[%c0_i32_12, %c0_i32_13] : memref<50x32xf32, #tpu.memory_space<vmem>> -> memref<1x32xf32, #tpu.memory_space<vmem>>
      %c0_i32_14 = arith.constant 0 : i32
      %12 = tpu.memref_slice %arg3[%10, %c0_i32_14] : memref<16x32xf32, #tpu.memory_space<vmem>> -> memref<1x32xf32, #tpu.memory_space<vmem>>
      tpu.wait_dma2 semaphore(%arg4 : memref<!tpu.dma_semaphore, #tpu.memory_space<semaphore_mem>>) src(%11 : memref<1x32xf32, #tpu.memory_space<vmem>>) dst(%12 : memref<1x32xf32, #tpu.memory_space<vmem>>)
      %c2_i32_15 = arith.constant 2 : i32
      %13 = arith.addi %6, %c2_i32_15 : i32
      %c0_i32_16 = arith.constant 0 : i32
      %c0_i32_17 = arith.constant 0 : i32
      %14 = tpu.memref_slice %arg2[%c0_i32_16, %c0_i32_17] : memref<50x32xf32, #tpu.memory_space<vmem>> -> memref<1x32xf32, #tpu.memory_space<vmem>>
      %c0_i32_18 = arith.constant 0 : i32
      %15 = tpu.memref_slice %arg3[%13, %c0_i32_18] : memref<16x32xf32, #tpu.memory_space<vmem>> -> memref<1x32xf32, #tpu.memory_space<vmem>>
      tpu.wait_dma2 semaphore(%arg4 : memref<!tpu.dma_semaphore, #tpu.memory_space<semaphore_mem>>) src(%14 : memref<1x32xf32, #tpu.memory_space<vmem>>) dst(%15 : memref<1x32xf32, #tpu.memory_space<vmem>>)
      %c3_i32 = arith.constant 3 : i32
      %16 = arith.addi %6, %c3_i32 : i32
      %c0_i32_19 = arith.constant 0 : i32
      %c0_i32_20 = arith.constant 0 : i32
      %17 = tpu.memref_slice %arg2[%c0_i32_19, %c0_i32_20] : memref<50x32xf32, #tpu.memory_space<vmem>> -> memref<1x32xf32, #tpu.memory_space<vmem>>
      %c0_i32_21 = arith.constant 0 : i32
      %18 = tpu.memref_slice %arg3[%16, %c0_i32_21] : memref<16x32xf32, #tpu.memory_space<vmem>> -> memref<1x32xf32, #tpu.memory_space<vmem>>
      tpu.wait_dma2 semaphore(%arg4 : memref<!tpu.dma_semaphore, #tpu.memory_space<semaphore_mem>>) src(%17 : memref<1x32xf32, #tpu.memory_space<vmem>>) dst(%18 : memref<1x32xf32, #tpu.memory_space<vmem>>)
      %c4_i32 = arith.constant 4 : i32
      %19 = arith.addi %6, %c4_i32 : i32
      %c0_i32_22 = arith.constant 0 : i32
      %c0_i32_23 = arith.constant 0 : i32
      %20 = tpu.memref_slice %arg2[%c0_i32_22, %c0_i32_23] : memref<50x32xf32, #tpu.memory_space<vmem>> -> memref<1x32xf32, #tpu.memory_space<vmem>>
      %c0_i32_24 = arith.constant 0 : i32
      %21 = tpu.memref_slice %arg3[%19, %c0_i32_24] : memref<16x32xf32, #tpu.memory_space<vmem>> -> memref<1x32xf32, #tpu.memory_space<vmem>>
      tpu.wait_dma2 semaphore(%arg4 : memref<!tpu.dma_semaphore, #tpu.memory_space<semaphore_mem>>) src(%20 : memref<1x32xf32, #tpu.memory_space<vmem>>) dst(%21 : memref<1x32xf32, #tpu.memory_space<vmem>>)
      %c5_i32 = arith.constant 5 : i32
      %22 = arith.addi %6, %c5_i32 : i32
      %c0_i32_25 = arith.constant 0 : i32
      %c0_i32_26 = arith.constant 0 : i32
      %23 = tpu.memref_slice %arg2[%c0_i32_25, %c0_i32_26] : memref<50x32xf32, #tpu.memory_space<vmem>> -> memref<1x32xf32, #tpu.memory_space<vmem>>
      %c0_i32_27 = arith.constant 0 : i32
      %24 = tpu.memref_slice %arg3[%22, %c0_i32_27] : memref<16x32xf32, #tpu.memory_space<vmem>> -> memref<1x32xf32, #tpu.memory_space<vmem>>
      tpu.wait_dma2 semaphore(%arg4 : memref<!tpu.dma_semaphore, #tpu.memory_space<semaphore_mem>>) src(%23 : memref<1x32xf32, #tpu.memory_space<vmem>>) dst(%24 : memref<1x32xf32, #tpu.memory_space<vmem>>)
      %c6_i32 = arith.constant 6 : i32
      %25 = arith.addi %6, %c6_i32 : i32
      %c0_i32_28 = arith.constant 0 : i32
      %c0_i32_29 = arith.constant 0 : i32
      %26 = tpu.memref_slice %arg2[%c0_i32_28, %c0_i32_29] : memref<50x32xf32, #tpu.memory_space<vmem>> -> memref<1x32xf32, #tpu.memory_space<vmem>>
      %c0_i32_30 = arith.constant 0 : i32
      %27 = tpu.memref_slice %arg3[%25, %c0_i32_30] : memref<16x32xf32, #tpu.memory_space<vmem>> -> memref<1x32xf32, #tpu.memory_space<vmem>>
      tpu.wait_dma2 semaphore(%arg4 : memref<!tpu.dma_semaphore, #tpu.memory_space<semaphore_mem>>) src(%26 : memref<1x32xf32, #tpu.memory_space<vmem>>) dst(%27 : memref<1x32xf32, #tpu.memory_space<vmem>>)
      %c7_i32 = arith.constant 7 : i32
      %28 = arith.addi %6, %c7_i32 : i32
      %c0_i32_31 = arith.constant 0 : i32
      %c0_i32_32 = arith.constant 0 : i32
      %29 = tpu.memref_slice %arg2[%c0_i32_31, %c0_i32_32] : memref<50x32xf32, #tpu.memory_space<vmem>> -> memref<1x32xf32, #tpu.memory_space<vmem>>
      %c0_i32_33 = arith.constant 0 : i32
      %30 = tpu.memref_slice %arg3[%28, %c0_i32_33] : memref<16x32xf32, #tpu.memory_space<vmem>> -> memref<1x32xf32, #tpu.memory_space<vmem>>
      tpu.wait_dma2 semaphore(%arg4 : memref<!tpu.dma_semaphore, #tpu.memory_space<semaphore_mem>>) src(%29 : memref<1x32xf32, #tpu.memory_space<vmem>>) dst(%30 : memref<1x32xf32, #tpu.memory_space<vmem>>)
    }
    %c2_i32_4 = arith.constant 2 : i32
    return
  }
  func.func @transform_0(%arg0: i32, %arg1: memref<16xi32, #tpu.memory_space<smem>>) -> (i32, i32) {
    %c0_i32 = arith.constant 0 : i32
    %c0_i32_0 = arith.constant 0 : i32
    %c0_i32_1 = arith.constant 0 : i32
    return %c0_i32, %c0_i32_0 : i32, i32
  }
  func.func @transform_1(%arg0: i32, %arg1: memref<16xi32, #tpu.memory_space<smem>>) -> (i32, i32) {
    %c0_i32 = arith.constant 0 : i32
    %c0_i32_0 = arith.constant 0 : i32
    return %arg0, %c0_i32 : i32, i32
  }
}

</mosaic_0001>

<llo_original>
// kernel: tpu_custom_call.1
$region0: #{tpu_custom_call.1}
  #allocation0 [shape = 'u32[]', space=smem, size = 0x4, offset = 0x4, fixed_abs, tag = 'smem constant byte address 0x4 - core index']
  #allocation1 [shape = 'u32[72,128]{1,0:T(1,128)}', space=vmem, size = 0x9000, scoped, tag = 'internal scratch']
  #allocation2 [shape = 's32[1]{0}', space=sflag, size = 0x4, scoped, tag = 'scratch operand']
  #allocation3 [shape = 's32[1]{0}', space=sflag, size = 0x4, scoped, tag = 'scoped memory for tpu_custom_call.1']
  #allocation4 [shape = 'u8[512]{0}', space=smem, size = 0x200, scoped, tag = 'prefetched SMEM operand 0']
  #allocation7 [shape = 's32[]', space=sflag, size = 0x4, offset = 0, fixed_abs, tag = 'sflag constant byte address 0x0 - dummy sync flag']
  #allocation8 [shape = 's32[]', space=sflag, size = 0x4, offset = 0, fixed_abs, tag = 'sflag constant byte address 0x0 - dummy sync flag']
  #allocation9 [shape = 's32[]', space=sflag, size = 0x4, offset = 0, fixed_abs, tag = 'sflag constant byte address 0x0 - dummy sync flag']
  #allocation10 [shape = 's32[]', space=sflag, size = 0x4, offset = 0, fixed_abs, tag = 'sflag constant byte address 0x0 - dummy sync flag']
  #allocation11 [shape = 's32[]', space=sflag, size = 0x4, offset = 0, fixed_abs, tag = 'sflag constant byte address 0x0 - dummy sync flag']
  #allocation12 [shape = 's32[]', space=sflag, size = 0x4, offset = 0, fixed_abs, tag = 'sflag constant byte address 0x0 - dummy sync flag']
  #allocation13 [shape = 's32[]', space=sflag, size = 0x4, offset = 0, fixed_abs, tag = 'sflag constant byte address 0x0 - dummy sync flag']
  #allocation14 [shape = 's32[]', space=sflag, size = 0x4, offset = 0, fixed_abs, tag = 'sflag constant byte address 0x0 - dummy sync flag']
  %s0 = inlined_call_operand.vmem [shape: s32[16], index: 0, kind: input, shape index: {}]
  %s1 = inlined_call_operand.vmem [shape: f32[50,32], index: 1, kind: input, shape index: {}]
  %s2 = inlined_call_operand.hbm [shape: f32[16,32], index: 2, kind: output, shape index: {}]
  %s3 = sld [smem:[#allocation0]]
  $region268: #{tpu_custom_call.1} parent=0
    _
  %s5 = ssub.s32 1, %s3
  %s6 = scalar_select 0, %s5, %s3
  %s8 = sshll.u32 %s0, 4
  %s9 = int_to_ptr.vmem [resolvable:$true] %s8
  %11 = dma.vmem_to_smem %s9, 16, [#allocation4], [#allocation3]
  %13 = dma.done [#allocation3], 16
  %14 = sfence
  $region1: #{tpu_custom_call.1} parent=0
    #allocation5 [shape = 'u8[8192]{0}', space=vmem, size = 0x2000, scoped, tag = 'output window, operand 0, single buffered']
    #allocation6 [shape = 's32[1]{0}', space=sflag, size = 0x4, scoped, tag = 'scoped memory for tpu_custom_call.1']
    %15 = vsyncpa [#allocation6], 0
    // Predicated region
    $region2: #{tpu_custom_call.1} parent=1 // pred_check
      _
    $region3: #{tpu_custom_call.1} parent=1 // pred_check_branch
      %17 = sbr.rel (0) target = $region5
    $region4: #{tpu_custom_call.1} parent=1 // pred_region
      _
    $region5: #{tpu_custom_call.1} parent=1 // pred_fallthru
      _
    %s18 = smul.u32 0, 16
    loop: start=0, step=1, limit=2
    $region6: #{tpu_custom_call.1} parent=1 // loop_pre_header
      _
    $region7: #{tpu_custom_call.1} parent=1 // loop_header
      %s20 = sphi 0, %s24
      %p21 = scmp.ge.s32.totalorder %s20, 2
    $region8: #{tpu_custom_call.1} parent=1 // loop_header_branch
      %23 = sbr.rel (%p21) target = $region12
    $region9: #{tpu_custom_call.1} parent=1 // loop_body
      %s25 = smul.u32 %s20, 8
      %s26 = sadd.s32 %s18, %s25
      %s27 = sld [smem:[#allocation4 + %s26]]
      %s28 = scalar_lea.vmem %s1, %s27
      %s29 = scalar_lea.vmem [#allocation5], %s25
      // Predicated region
      $region13: #{tpu_custom_call.1} parent=9 // pred_check
        _
      $region14: #{tpu_custom_call.1} parent=9 // pred_check_branch
        %31 = sbr.rel target = $region16
      $region15: #{tpu_custom_call.1} parent=9 // pred_region
        // Predicated region
        $region28: #{tpu_custom_call.1} parent=15 // pred_check
          _
        $region29: #{tpu_custom_call.1} parent=15 // pred_check_branch
          %47 = sbr.rel (0) target = $region31
        $region30: #{tpu_custom_call.1} parent=15 // pred_region
          %s49 = ssub.s32 2, 1
          loop: start=0, step=1, limit=1
          $region32: #{tpu_custom_call.1} parent=30 // loop_pre_header
            _
          $region33: #{tpu_custom_call.1} parent=30 // loop_header
            %s51 = sphi 0, %s55
            %p52 = scmp.ge.s32.totalorder %s51, 1
            %s56 = sphi %s28, %s28
            %s57 = sphi %s29, %s29
          $region34: #{tpu_custom_call.1} parent=30 // loop_header_branch
            %54 = sbr.rel (%p52) target = $region38
          $region35: #{tpu_custom_call.1} parent=30 // loop_body
            %v58 = vld [vmem:[%s56] sm:%s49]
            %59 = vst [vmem:[%s57] sm:%s49] %v58
          $region36: #{tpu_custom_call.1} parent=30 // loop_footer
            %s55 = sadd.s32 1, %s51
          $region37: #{tpu_custom_call.1} parent=30 // loop_footer_branch
            %50 = sbr.rel target = $region33
          $region38: #{tpu_custom_call.1} parent=30 // loop_exit
            _
        $region31: #{tpu_custom_call.1} parent=15 // pred_fallthru
          _
      $region16: #{tpu_custom_call.1} parent=9 // pred_fallthru
        _
      // Predicated region
      $region17: #{tpu_custom_call.1} parent=9 // pred_check
        _
      $region18: #{tpu_custom_call.1} parent=9 // pred_check_branch
        %33 = sbr.rel (0) target = $region20
      $region19: #{tpu_custom_call.1} parent=9 // pred_region
        %s35 = ssub.s32 2, 1
        loop: start=0, step=1, limit=1
        $region21: #{tpu_custom_call.1} parent=19 // loop_pre_header
          _
        $region22: #{tpu_custom_call.1} parent=19 // loop_header
          %s37 = sphi 0, %s41
          %p38 = scmp.ge.s32.totalorder %s37, 1
          %s42 = sphi %s28, %s28
          %s43 = sphi %s29, %s29
        $region23: #{tpu_custom_call.1} parent=19 // loop_header_branch
          %40 = sbr.rel (%p38) target = $region27
        $region24: #{tpu_custom_call.1} parent=19 // loop_body
          %v44 = vld [vmem:[%s42] sm:%s35]
          %45 = vst [vmem:[%s43] sm:%s35] %v44
        $region25: #{tpu_custom_call.1} parent=19 // loop_footer
          %s41 = sadd.s32 1, %s37
        $region26: #{tpu_custom_call.1} parent=19 // loop_footer_branch
          %36 = sbr.rel target = $region22
        $region27: #{tpu_custom_call.1} parent=19 // loop_exit
          _
      $region20: #{tpu_custom_call.1} parent=9 // pred_fallthru
        _
      // Predicated region
      $region39: #{tpu_custom_call.1} parent=9 // pred_check
        _
      $region40: #{tpu_custom_call.1} parent=9 // pred_check_branch
        %62 = sbr.rel (0) target = $region42
      $region41: #{tpu_custom_call.1} parent=9 // pred_region
        %63 = vsyncadd [#allocation2], 16
      $region42: #{tpu_custom_call.1} parent=9 // pred_fallthru
        _
      %s64 = sadd.s32 %s25, 1
      %s65 = sadd.s32 %s18, %s64
      %s66 = sld [smem:[#allocation4 + %s65]]
      %s67 = scalar_lea.vmem %s1, %s66
      %s68 = scalar_lea.vmem [#allocation5], %s64
      // Predicated region
      $region43: #{tpu_custom_call.1} parent=9 // pred_check
        _
      $region44: #{tpu_custom_call.1} parent=9 // pred_check_branch
        %70 = sbr.rel target = $region46
      $region45: #{tpu_custom_call.1} parent=9 // pred_region
        // Predicated region
        $region58: #{tpu_custom_call.1} parent=45 // pred_check
          _
        $region59: #{tpu_custom_call.1} parent=45 // pred_check_branch
          %86 = sbr.rel (0) target = $region61
        $region60: #{tpu_custom_call.1} parent=45 // pred_region
          %s88 = ssub.s32 2, 1
          loop: start=0, step=1, limit=1
          $region62: #{tpu_custom_call.1} parent=60 // loop_pre_header
            _
          $region63: #{tpu_custom_call.1} parent=60 // loop_header
            %s90 = sphi 0, %s94
            %p91 = scmp.ge.s32.totalorder %s90, 1
            %s95 = sphi %s67, %s67
            %s96 = sphi %s68, %s68
          $region64: #{tpu_custom_call.1} parent=60 // loop_header_branch
            %93 = sbr.rel (%p91) target = $region68
          $region65: #{tpu_custom_call.1} parent=60 // loop_body
            %v97 = vld [vmem:[%s95] sm:%s88]
            %98 = vst [vmem:[%s96] sm:%s88] %v97
          $region66: #{tpu_custom_call.1} parent=60 // loop_footer
            %s94 = sadd.s32 1, %s90
          $region67: #{tpu_custom_call.1} parent=60 // loop_footer_branch
            %89 = sbr.rel target = $region63
          $region68: #{tpu_custom_call.1} parent=60 // loop_exit
            _
        $region61: #{tpu_custom_call.1} parent=45 // pred_fallthru
          _
      $region46: #{tpu_custom_call.1} parent=9 // pred_fallthru
        _
      // Predicated region
      $region47: #{tpu_custom_call.1} parent=9 // pred_check
        _
      $region48: #{tpu_custom_call.1} parent=9 // pred_check_branch
        %72 = sbr.rel (0) target = $region50
      $region49: #{tpu_custom_call.1} parent=9 // pred_region
        %s74 = ssub.s32 2, 1
        loop: start=0, step=1, limit=1
        $region51: #{tpu_custom_call.1} parent=49 // loop_pre_header
          _
        $region52: #{tpu_custom_call.1} parent=49 // loop_header
          %s76 = sphi 0, %s80
          %p77 = scmp.ge.s32.totalorder %s76, 1
          %s81 = sphi %s67, %s67
          %s82 = sphi %s68, %s68
        $region53: #{tpu_custom_call.1} parent=49 // loop_header_branch
          %79 = sbr.rel (%p77) target = $region57
        $region54: #{tpu_custom_call.1} parent=49 // loop_body
          %v83 = vld [vmem:[%s81] sm:%s74]
          %84 = vst [vmem:[%s82] sm:%s74] %v83
        $region55: #{tpu_custom_call.1} parent=49 // loop_footer
          %s80 = sadd.s32 1, %s76
        $region56: #{tpu_custom_call.1} parent=49 // loop_footer_branch
          %75 = sbr.rel target = $region52
        $region57: #{tpu_custom_call.1} parent=49 // loop_exit
          _
      $region50: #{tpu_custom_call.1} parent=9 // pred_fallthru
        _
      // Predicated region
      $region69: #{tpu_custom_call.1} parent=9 // pred_check
        _
      $region70: #{tpu_custom_call.1} parent=9 // pred_check_branch
        %101 = sbr.rel (0) target = $region72
      $region71: #{tpu_custom_call.1} parent=9 // pred_region
        %102 = vsyncadd [#allocation2], 16
      $region72: #{tpu_custom_call.1} parent=9 // pred_fallthru
        _
      %s103 = sadd.s32 %s25, 2
      %s104 = sadd.s32 %s18, %s103
      %s105 = sld [smem:[#allocation4 + %s104]]
      %s106 = scalar_lea.vmem %s1, %s105
      %s107 = scalar_lea.vmem [#allocation5], %s103
      // Predicated region
      $region73: #{tpu_custom_call.1} parent=9 // pred_check
        _
      $region74: #{tpu_custom_call.1} parent=9 // pred_check_branch
        %109 = sbr.rel target = $region76
      $region75: #{tpu_custom_call.1} parent=9 // pred_region
        // Predicated region
        $region88: #{tpu_custom_call.1} parent=75 // pred_check
          _
        $region89: #{tpu_custom_call.1} parent=75 // pred_check_branch
          %125 = sbr.rel (0) target = $region91
        $region90: #{tpu_custom_call.1} parent=75 // pred_region
          %s127 = ssub.s32 2, 1
          loop: start=0, step=1, limit=1
          $region92: #{tpu_custom_call.1} parent=90 // loop_pre_header
            _
          $region93: #{tpu_custom_call.1} parent=90 // loop_header
            %s129 = sphi 0, %s133
            %p130 = scmp.ge.s32.totalorder %s129, 1
            %s134 = sphi %s106, %s106
            %s135 = sphi %s107, %s107
          $region94: #{tpu_custom_call.1} parent=90 // loop_header_branch
            %132 = sbr.rel (%p130) target = $region98
          $region95: #{tpu_custom_call.1} parent=90 // loop_body
            %v136 = vld [vmem:[%s134] sm:%s127]
            %137 = vst [vmem:[%s135] sm:%s127] %v136
          $region96: #{tpu_custom_call.1} parent=90 // loop_footer
            %s133 = sadd.s32 1, %s129
          $region97: #{tpu_custom_call.1} parent=90 // loop_footer_branch
            %128 = sbr.rel target = $region93
          $region98: #{tpu_custom_call.1} parent=90 // loop_exit
            _
        $region91: #{tpu_custom_call.1} parent=75 // pred_fallthru
          _
      $region76: #{tpu_custom_call.1} parent=9 // pred_fallthru
        _
      // Predicated region
      $region77: #{tpu_custom_call.1} parent=9 // pred_check
        _
      $region78: #{tpu_custom_call.1} parent=9 // pred_check_branch
        %111 = sbr.rel (0) target = $region80
      $region79: #{tpu_custom_call.1} parent=9 // pred_region
        %s113 = ssub.s32 2, 1
        loop: start=0, step=1, limit=1
        $region81: #{tpu_custom_call.1} parent=79 // loop_pre_header
          _
        $region82: #{tpu_custom_call.1} parent=79 // loop_header
          %s115 = sphi 0, %s119
          %p116 = scmp.ge.s32.totalorder %s115, 1
          %s120 = sphi %s106, %s106
          %s121 = sphi %s107, %s107
        $region83: #{tpu_custom_call.1} parent=79 // loop_header_branch
          %118 = sbr.rel (%p116) target = $region87
        $region84: #{tpu_custom_call.1} parent=79 // loop_body
          %v122 = vld [vmem:[%s120] sm:%s113]
          %123 = vst [vmem:[%s121] sm:%s113] %v122
        $region85: #{tpu_custom_call.1} parent=79 // loop_footer
          %s119 = sadd.s32 1, %s115
        $region86: #{tpu_custom_call.1} parent=79 // loop_footer_branch
          %114 = sbr.rel target = $region82
        $region87: #{tpu_custom_call.1} parent=79 // loop_exit
          _
      $region80: #{tpu_custom_call.1} parent=9 // pred_fallthru
        _
      // Predicated region
      $region99: #{tpu_custom_call.1} parent=9 // pred_check
        _
      $region100: #{tpu_custom_call.1} parent=9 // pred_check_branch
        %140 = sbr.rel (0) target = $region102
      $region101: #{tpu_custom_call.1} parent=9 // pred_region
        %141 = vsyncadd [#allocation2], 16
      $region102: #{tpu_custom_call.1} parent=9 // pred_fallthru
        _
      %s142 = sadd.s32 %s25, 3
      %s143 = sadd.s32 %s18, %s142
      %s144 = sld [smem:[#allocation4 + %s143]]
      %s145 = scalar_lea.vmem %s1, %s144
      %s146 = scalar_lea.vmem [#allocation5], %s142
      // Predicated region
      $region103: #{tpu_custom_call.1} parent=9 // pred_check
        _
      $region104: #{tpu_custom_call.1} parent=9 // pred_check_branch
        %148 = sbr.rel target = $region106
      $region105: #{tpu_custom_call.1} parent=9 // pred_region
        // Predicated region
        $region118: #{tpu_custom_call.1} parent=105 // pred_check
          _
        $region119: #{tpu_custom_call.1} parent=105 // pred_check_branch
          %164 = sbr.rel (0) target = $region121
        $region120: #{tpu_custom_call.1} parent=105 // pred_region
          %s166 = ssub.s32 2, 1
          loop: start=0, step=1, limit=1
          $region122: #{tpu_custom_call.1} parent=120 // loop_pre_header
            _
          $region123: #{tpu_custom_call.1} parent=120 // loop_header
            %s168 = sphi 0, %s172
            %p169 = scmp.ge.s32.totalorder %s168, 1
            %s173 = sphi %s145, %s145
            %s174 = sphi %s146, %s146
          $region124: #{tpu_custom_call.1} parent=120 // loop_header_branch
            %171 = sbr.rel (%p169) target = $region128
          $region125: #{tpu_custom_call.1} parent=120 // loop_body
            %v175 = vld [vmem:[%s173] sm:%s166]
            %176 = vst [vmem:[%s174] sm:%s166] %v175
          $region126: #{tpu_custom_call.1} parent=120 // loop_footer
            %s172 = sadd.s32 1, %s168
          $region127: #{tpu_custom_call.1} parent=120 // loop_footer_branch
            %167 = sbr.rel target = $region123
          $region128: #{tpu_custom_call.1} parent=120 // loop_exit
            _
        $region121: #{tpu_custom_call.1} parent=105 // pred_fallthru
          _
      $region106: #{tpu_custom_call.1} parent=9 // pred_fallthru
        _
      // Predicated region
      $region107: #{tpu_custom_call.1} parent=9 // pred_check
        _
      $region108: #{tpu_custom_call.1} parent=9 // pred_check_branch
        %150 = sbr.rel (0) target = $region110
      $region109: #{tpu_custom_call.1} parent=9 // pred_region
        %s152 = ssub.s32 2, 1
        loop: start=0, step=1, limit=1
        $region111: #{tpu_custom_call.1} parent=109 // loop_pre_header
          _
        $region112: #{tpu_custom_call.1} parent=109 // loop_header
          %s154 = sphi 0, %s158
          %p155 = scmp.ge.s32.totalorder %s154, 1
          %s159 = sphi %s145, %s145
          %s160 = sphi %s146, %s146
        $region113: #{tpu_custom_call.1} parent=109 // loop_header_branch
          %157 = sbr.rel (%p155) target = $region117
        $region114: #{tpu_custom_call.1} parent=109 // loop_body
          %v161 = vld [vmem:[%s159] sm:%s152]
          %162 = vst [vmem:[%s160] sm:%s152] %v161
        $region115: #{tpu_custom_call.1} parent=109 // loop_footer
          %s158 = sadd.s32 1, %s154
        $region116: #{tpu_custom_call.1} parent=109 // loop_footer_branch
          %153 = sbr.rel target = $region112
        $region117: #{tpu_custom_call.1} parent=109 // loop_exit
          _
      $region110: #{tpu_custom_call.1} parent=9 // pred_fallthru
        _
      // Predicated region
      $region129: #{tpu_custom_call.1} parent=9 // pred_check
        _
      $region130: #{tpu_custom_call.1} parent=9 // pred_check_branch
        %179 = sbr.rel (0) target = $region132
      $region131: #{tpu_custom_call.1} parent=9 // pred_region
        %180 = vsyncadd [#allocation2], 16
      $region132: #{tpu_custom_call.1} parent=9 // pred_fallthru
        _
      %s181 = sadd.s32 %s25, 4
      %s182 = sadd.s32 %s18, %s181
      %s183 = sld [smem:[#allocation4 + %s182]]
      %s184 = scalar_lea.vmem %s1, %s183
      %s185 = scalar_lea.vmem [#allocation5], %s181
      // Predicated region
      $region133: #{tpu_custom_call.1} parent=9 // pred_check
        _
      $region134: #{tpu_custom_call.1} parent=9 // pred_check_branch
        %187 = sbr.rel target = $region136
      $region135: #{tpu_custom_call.1} parent=9 // pred_region
        // Predicated region
        $region148: #{tpu_custom_call.1} parent=135 // pred_check
          _
        $region149: #{tpu_custom_call.1} parent=135 // pred_check_branch
          %203 = sbr.rel (0) target = $region151
        $region150: #{tpu_custom_call.1} parent=135 // pred_region
          %s205 = ssub.s32 2, 1
          loop: start=0, step=1, limit=1
          $region152: #{tpu_custom_call.1} parent=150 // loop_pre_header
            _
          $region153: #{tpu_custom_call.1} parent=150 // loop_header
            %s207 = sphi 0, %s211
            %p208 = scmp.ge.s32.totalorder %s207, 1
            %s212 = sphi %s184, %s184
            %s213 = sphi %s185, %s185
          $region154: #{tpu_custom_call.1} parent=150 // loop_header_branch
            %210 = sbr.rel (%p208) target = $region158
          $region155: #{tpu_custom_call.1} parent=150 // loop_body
            %v214 = vld [vmem:[%s212] sm:%s205]
            %215 = vst [vmem:[%s213] sm:%s205] %v214
          $region156: #{tpu_custom_call.1} parent=150 // loop_footer
            %s211 = sadd.s32 1, %s207
          $region157: #{tpu_custom_call.1} parent=150 // loop_footer_branch
            %206 = sbr.rel target = $region153
          $region158: #{tpu_custom_call.1} parent=150 // loop_exit
            _
        $region151: #{tpu_custom_call.1} parent=135 // pred_fallthru
          _
      $region136: #{tpu_custom_call.1} parent=9 // pred_fallthru
        _
      // Predicated region
      $region137: #{tpu_custom_call.1} parent=9 // pred_check
        _
      $region138: #{tpu_custom_call.1} parent=9 // pred_check_branch
        %189 = sbr.rel (0) target = $region140
      $region139: #{tpu_custom_call.1} parent=9 // pred_region
        %s191 = ssub.s32 2, 1
        loop: start=0, step=1, limit=1
        $region141: #{tpu_custom_call.1} parent=139 // loop_pre_header
          _
        $region142: #{tpu_custom_call.1} parent=139 // loop_header
          %s193 = sphi 0, %s197
          %p194 = scmp.ge.s32.totalorder %s193, 1
          %s198 = sphi %s184, %s184
          %s199 = sphi %s185, %s185
        $region143: #{tpu_custom_call.1} parent=139 // loop_header_branch
          %196 = sbr.rel (%p194) target = $region147
        $region144: #{tpu_custom_call.1} parent=139 // loop_body
          %v200 = vld [vmem:[%s198] sm:%s191]
          %201 = vst [vmem:[%s199] sm:%s191] %v200
        $region145: #{tpu_custom_call.1} parent=139 // loop_footer
          %s197 = sadd.s32 1, %s193
        $region146: #{tpu_custom_call.1} parent=139 // loop_footer_branch
          %192 = sbr.rel target = $region142
        $region147: #{tpu_custom_call.1} parent=139 // loop_exit
          _
      $region140: #{tpu_custom_call.1} parent=9 // pred_fallthru
        _
      // Predicated region
      $region159: #{tpu_custom_call.1} parent=9 // pred_check
        _
      $region160: #{tpu_custom_call.1} parent=9 // pred_check_branch
        %218 = sbr.rel (0) target = $region162
      $region161: #{tpu_custom_call.1} parent=9 // pred_region
        %219 = vsyncadd [#allocation2], 16
      $region162: #{tpu_custom_call.1} parent=9 // pred_fallthru
        _
      %s220 = sadd.s32 %s25, 5
      %s221 = sadd.s32 %s18, %s220
      %s222 = sld [smem:[#allocation4 + %s221]]
      %s223 = scalar_lea.vmem %s1, %s222
      %s224 = scalar_lea.vmem [#allocation5], %s220
      // Predicated region
      $region163: #{tpu_custom_call.1} parent=9 // pred_check
        _
      $region164: #{tpu_custom_call.1} parent=9 // pred_check_branch
        %226 = sbr.rel target = $region166
      $region165: #{tpu_custom_call.1} parent=9 // pred_region
        // Predicated region
        $region178: #{tpu_custom_call.1} parent=165 // pred_check
          _
        $region179: #{tpu_custom_call.1} parent=165 // pred_check_branch
          %242 = sbr.rel (0) target = $region181
        $region180: #{tpu_custom_call.1} parent=165 // pred_region
          %s244 = ssub.s32 2, 1
          loop: start=0, step=1, limit=1
          $region182: #{tpu_custom_call.1} parent=180 // loop_pre_header
            _
          $region183: #{tpu_custom_call.1} parent=180 // loop_header
            %s246 = sphi 0, %s250
            %p247 = scmp.ge.s32.totalorder %s246, 1
            %s251 = sphi %s223, %s223
            %s252 = sphi %s224, %s224
          $region184: #{tpu_custom_call.1} parent=180 // loop_header_branch
            %249 = sbr.rel (%p247) target = $region188
          $region185: #{tpu_custom_call.1} parent=180 // loop_body
            %v253 = vld [vmem:[%s251] sm:%s244]
            %254 = vst [vmem:[%s252] sm:%s244] %v253
          $region186: #{tpu_custom_call.1} parent=180 // loop_footer
            %s250 = sadd.s32 1, %s246
          $region187: #{tpu_custom_call.1} parent=180 // loop_footer_branch
            %245 = sbr.rel target = $region183
          $region188: #{tpu_custom_call.1} parent=180 // loop_exit
            _
        $region181: #{tpu_custom_call.1} parent=165 // pred_fallthru
          _
      $region166: #{tpu_custom_call.1} parent=9 // pred_fallthru
        _
      // Predicated region
      $region167: #{tpu_custom_call.1} parent=9 // pred_check
        _
      $region168: #{tpu_custom_call.1} parent=9 // pred_check_branch
        %228 = sbr.rel (0) target = $region170
      $region169: #{tpu_custom_call.1} parent=9 // pred_region
        %s230 = ssub.s32 2, 1
        loop: start=0, step=1, limit=1
        $region171: #{tpu_custom_call.1} parent=169 // loop_pre_header
          _
        $region172: #{tpu_custom_call.1} parent=169 // loop_header
          %s232 = sphi 0, %s236
          %p233 = scmp.ge.s32.totalorder %s232, 1
          %s237 = sphi %s223, %s223
          %s238 = sphi %s224, %s224
        $region173: #{tpu_custom_call.1} parent=169 // loop_header_branch
          %235 = sbr.rel (%p233) target = $region177
        $region174: #{tpu_custom_call.1} parent=169 // loop_body
          %v239 = vld [vmem:[%s237] sm:%s230]
          %240 = vst [vmem:[%s238] sm:%s230] %v239
        $region175: #{tpu_custom_call.1} parent=169 // loop_footer
          %s236 = sadd.s32 1, %s232
        $region176: #{tpu_custom_call.1} parent=169 // loop_footer_branch
          %231 = sbr.rel target = $region172
        $region177: #{tpu_custom_call.1} parent=169 // loop_exit
          _
      $region170: #{tpu_custom_call.1} parent=9 // pred_fallthru
        _
      // Predicated region
      $region189: #{tpu_custom_call.1} parent=9 // pred_check
        _
      $region190: #{tpu_custom_call.1} parent=9 // pred_check_branch
        %257 = sbr.rel (0) target = $region192
      $region191: #{tpu_custom_call.1} parent=9 // pred_region
        %258 = vsyncadd [#allocation2], 16
      $region192: #{tpu_custom_call.1} parent=9 // pred_fallthru
        _
      %s259 = sadd.s32 %s25, 6
      %s260 = sadd.s32 %s18, %s259
      %s261 = sld [smem:[#allocation4 + %s260]]
      %s262 = scalar_lea.vmem %s1, %s261
      %s263 = scalar_lea.vmem [#allocation5], %s259
      // Predicated region
      $region193: #{tpu_custom_call.1} parent=9 // pred_check
        _
      $region194: #{tpu_custom_call.1} parent=9 // pred_check_branch
        %265 = sbr.rel target = $region196
      $region195: #{tpu_custom_call.1} parent=9 // pred_region
        // Predicated region
        $region208: #{tpu_custom_call.1} parent=195 // pred_check
          _
        $region209: #{tpu_custom_call.1} parent=195 // pred_check_branch
          %281 = sbr.rel (0) target = $region211
        $region210: #{tpu_custom_call.1} parent=195 // pred_region
          %s283 = ssub.s32 2, 1
          loop: start=0, step=1, limit=1
          $region212: #{tpu_custom_call.1} parent=210 // loop_pre_header
            _
          $region213: #{tpu_custom_call.1} parent=210 // loop_header
            %s285 = sphi 0, %s289
            %p286 = scmp.ge.s32.totalorder %s285, 1
            %s290 = sphi %s262, %s262
            %s291 = sphi %s263, %s263
          $region214: #{tpu_custom_call.1} parent=210 // loop_header_branch
            %288 = sbr.rel (%p286) target = $region218
          $region215: #{tpu_custom_call.1} parent=210 // loop_body
            %v292 = vld [vmem:[%s290] sm:%s283]
            %293 = vst [vmem:[%s291] sm:%s283] %v292
          $region216: #{tpu_custom_call.1} parent=210 // loop_footer
            %s289 = sadd.s32 1, %s285
          $region217: #{tpu_custom_call.1} parent=210 // loop_footer_branch
            %284 = sbr.rel target = $region213
          $region218: #{tpu_custom_call.1} parent=210 // loop_exit
            _
        $region211: #{tpu_custom_call.1} parent=195 // pred_fallthru
          _
      $region196: #{tpu_custom_call.1} parent=9 // pred_fallthru
        _
      // Predicated region
      $region197: #{tpu_custom_call.1} parent=9 // pred_check
        _
      $region198: #{tpu_custom_call.1} parent=9 // pred_check_branch
        %267 = sbr.rel (0) target = $region200
      $region199: #{tpu_custom_call.1} parent=9 // pred_region
        %s269 = ssub.s32 2, 1
        loop: start=0, step=1, limit=1
        $region201: #{tpu_custom_call.1} parent=199 // loop_pre_header
          _
        $region202: #{tpu_custom_call.1} parent=199 // loop_header
          %s271 = sphi 0, %s275
          %p272 = scmp.ge.s32.totalorder %s271, 1
          %s276 = sphi %s262, %s262
          %s277 = sphi %s263, %s263
        $region203: #{tpu_custom_call.1} parent=199 // loop_header_branch
          %274 = sbr.rel (%p272) target = $region207
        $region204: #{tpu_custom_call.1} parent=199 // loop_body
          %v278 = vld [vmem:[%s276] sm:%s269]
          %279 = vst [vmem:[%s277] sm:%s269] %v278
        $region205: #{tpu_custom_call.1} parent=199 // loop_footer
          %s275 = sadd.s32 1, %s271
        $region206: #{tpu_custom_call.1} parent=199 // loop_footer_branch
          %270 = sbr.rel target = $region202
        $region207: #{tpu_custom_call.1} parent=199 // loop_exit
          _
      $region200: #{tpu_custom_call.1} parent=9 // pred_fallthru
        _
      // Predicated region
      $region219: #{tpu_custom_call.1} parent=9 // pred_check
        _
      $region220: #{tpu_custom_call.1} parent=9 // pred_check_branch
        %296 = sbr.rel (0) target = $region222
      $region221: #{tpu_custom_call.1} parent=9 // pred_region
        %297 = vsyncadd [#allocation2], 16
      $region222: #{tpu_custom_call.1} parent=9 // pred_fallthru
        _
      %s298 = sadd.s32 %s25, 7
      %s299 = sadd.s32 %s18, %s298
      %s300 = sld [smem:[#allocation4 + %s299]]
      %s301 = scalar_lea.vmem %s1, %s300
      %s302 = scalar_lea.vmem [#allocation5], %s298
      // Predicated region
      $region223: #{tpu_custom_call.1} parent=9 // pred_check
        _
      $region224: #{tpu_custom_call.1} parent=9 // pred_check_branch
        %304 = sbr.rel target = $region226
      $region225: #{tpu_custom_call.1} parent=9 // pred_region
        // Predicated region
        $region238: #{tpu_custom_call.1} parent=225 // pred_check
          _
        $region239: #{tpu_custom_call.1} parent=225 // pred_check_branch
          %320 = sbr.rel (0) target = $region241
        $region240: #{tpu_custom_call.1} parent=225 // pred_region
          %s322 = ssub.s32 2, 1
          loop: start=0, step=1, limit=1
          $region242: #{tpu_custom_call.1} parent=240 // loop_pre_header
            _
          $region243: #{tpu_custom_call.1} parent=240 // loop_header
            %s324 = sphi 0, %s328
            %p325 = scmp.ge.s32.totalorder %s324, 1
            %s329 = sphi %s301, %s301
            %s330 = sphi %s302, %s302
          $region244: #{tpu_custom_call.1} parent=240 // loop_header_branch
            %327 = sbr.rel (%p325) target = $region248
          $region245: #{tpu_custom_call.1} parent=240 // loop_body
            %v331 = vld [vmem:[%s329] sm:%s322]
            %332 = vst [vmem:[%s330] sm:%s322] %v331
          $region246: #{tpu_custom_call.1} parent=240 // loop_footer
            %s328 = sadd.s32 1, %s324
          $region247: #{tpu_custom_call.1} parent=240 // loop_footer_branch
            %323 = sbr.rel target = $region243
          $region248: #{tpu_custom_call.1} parent=240 // loop_exit
            _
        $region241: #{tpu_custom_call.1} parent=225 // pred_fallthru
          _
      $region226: #{tpu_custom_call.1} parent=9 // pred_fallthru
        _
      // Predicated region
      $region227: #{tpu_custom_call.1} parent=9 // pred_check
        _
      $region228: #{tpu_custom_call.1} parent=9 // pred_check_branch
        %306 = sbr.rel (0) target = $region230
      $region229: #{tpu_custom_call.1} parent=9 // pred_region
        %s308 = ssub.s32 2, 1
        loop: start=0, step=1, limit=1
        $region231: #{tpu_custom_call.1} parent=229 // loop_pre_header
          _
        $region232: #{tpu_custom_call.1} parent=229 // loop_header
          %s310 = sphi 0, %s314
          %p311 = scmp.ge.s32.totalorder %s310, 1
          %s315 = sphi %s301, %s301
          %s316 = sphi %s302, %s302
        $region233: #{tpu_custom_call.1} parent=229 // loop_header_branch
          %313 = sbr.rel (%p311) target = $region237
        $region234: #{tpu_custom_call.1} parent=229 // loop_body
          %v317 = vld [vmem:[%s315] sm:%s308]
          %318 = vst [vmem:[%s316] sm:%s308] %v317
        $region235: #{tpu_custom_call.1} parent=229 // loop_footer
          %s314 = sadd.s32 1, %s310
        $region236: #{tpu_custom_call.1} parent=229 // loop_footer_branch
          %309 = sbr.rel target = $region232
        $region237: #{tpu_custom_call.1} parent=229 // loop_exit
          _
      $region230: #{tpu_custom_call.1} parent=9 // pred_fallthru
        _
      // Predicated region
      $region249: #{tpu_custom_call.1} parent=9 // pred_check
        _
      $region250: #{tpu_custom_call.1} parent=9 // pred_check_branch
        %335 = sbr.rel (0) target = $region252
      $region251: #{tpu_custom_call.1} parent=9 // pred_region
        %336 = vsyncadd [#allocation2], 16
      $region252: #{tpu_custom_call.1} parent=9 // pred_fallthru
        _
    $region10: #{tpu_custom_call.1} parent=1 // loop_footer
      %s24 = sadd.s32 1, %s20
    $region11: #{tpu_custom_call.1} parent=1 // loop_footer_branch
      %19 = sbr.rel target = $region7
    $region12: #{tpu_custom_call.1} parent=1 // loop_exit
      _
    loop: start=0, step=1, limit=2
    $region253: #{tpu_custom_call.1} parent=1 // loop_pre_header
      _
    $region254: #{tpu_custom_call.1} parent=1 // loop_header
      %s338 = sphi 0, %s342
      %p339 = scmp.ge.s32.totalorder %s338, 2
    $region255: #{tpu_custom_call.1} parent=1 // loop_header_branch
      %341 = sbr.rel (%p339) target = $region259
    $region256: #{tpu_custom_call.1} parent=1 // loop_body
      %s343 = smul.u32 %s338, 8
      %s344 = smul.u32 1, 1
      %s345 = sshll.u32 %s344, 4
      %346 = dma.done [#allocation2], %s345
      %s347 = sshll.u32 %s344, 4
      %348 = dma.done [#allocation2], %s347
      %s349 = sshll.u32 %s344, 4
      %350 = dma.done [#allocation2], %s349
      %s351 = sshll.u32 %s344, 4
      %352 = dma.done [#allocation2], %s351
      %s353 = sshll.u32 %s344, 4
      %354 = dma.done [#allocation2], %s353
      %s355 = sshll.u32 %s344, 4
      %356 = dma.done [#allocation2], %s355
      %s357 = sshll.u32 %s344, 4
      %358 = dma.done [#allocation2], %s357
      %s359 = sshll.u32 %s344, 4
      %360 = dma.done [#allocation2], %s359
    $region257: #{tpu_custom_call.1} parent=1 // loop_footer
      %s342 = sadd.s32 1, %s338
    $region258: #{tpu_custom_call.1} parent=1 // loop_footer_branch
      %337 = sbr.rel target = $region254
    $region259: #{tpu_custom_call.1} parent=1 // loop_exit
      _
    // Predicated region
    $region260: #{tpu_custom_call.1} parent=1 // pred_check
      _
    $region261: #{tpu_custom_call.1} parent=1 // pred_check_branch
      %362 = sbr.rel (0) target = $region263
    $region262: #{tpu_custom_call.1} parent=1 // pred_region
      %364 = vsyncadd [#allocation6], 0
      %s365 = sshll.u32 [#allocation5], 4
      %s366 = int_to_ptr.vmem [resolvable:$true] %s365
      %s367 = sshll.u32 %s2, 4
      %s368 = int_to_ptr.hbm [resolvable:$true] %s367
      %373 = dma.vmem_to_hbm [thread:$0]  %s366, 256, %s368, [#allocation6], 128, 128, 8
    $region263: #{tpu_custom_call.1} parent=1 // pred_fallthru
      _
    // Predicated region
    $region264: #{tpu_custom_call.1} parent=1 // pred_check
      _
    $region265: #{tpu_custom_call.1} parent=1 // pred_check_branch
      %375 = sbr.rel (0) target = $region267
    $region266: #{tpu_custom_call.1} parent=1 // pred_region
      %377 = dma.done [#allocation6], 256
    $region267: #{tpu_custom_call.1} parent=1 // pred_fallthru
      _
    %378 = vsyncpa [#allocation6], 1
  %379 = vsyncmov [#allocation2]
  %s380 = vpop.sfrf %379
  %p381 = scmp.eq.s32.totalorder %s380, 0
  %p382 = pneg %p381
  %384 = shalt.err (%p382)

</llo_original>
